<compile_context>
chip_gen: v5e
topology: v5e:2x2
jax: 0.10.0
libtpu: 0.0.40
codegen_flags: <defaults>
</compile_context>

<pallas_src>
import functools

import jax
import jax.numpy as jnp
from jax import lax
from jax.experimental import pallas as pl
from jax.experimental.pallas import tpu as pltpu


# ------------------------------ Pallas kernel ------------------------------ #

def _fused_conv_gn_swish_kernel(p_ref, w_ref, prm_ref, a_ref, o_ref, *,
                                eps, is_activate, nb, ohw):
    # p_ref  : [1, K, nb*ohw]     bf16 im2col patches for nb batch elements (lane-concat)
    # w_ref  : [out_c, K]         bf16 flattened conv weights
    # prm_ref: [out_c, 3]         f32 packed per-channel params: (conv bias, gamma, beta)
    # a_ref  : [out_c, out_c]     f32 group-averaging matrix (1/(Cg*ohw) within a group)
    # o_ref  : [1, nb, out_c, ohw] f32 output (lane-dense: ohw on lanes)
    bias = prm_ref[:, 0:1]
    gamma = prm_ref[:, 1:2]
    beta = prm_ref[:, 2:3]

    # Conv as matmul: one MXU weight push covers nb*ohw lanes; f32 accumulate.
    acc_all = jnp.dot(w_ref[...], p_ref[0],
                      preferred_element_type=jnp.float32)          # [out_c, nb*ohw]

    # GroupNorm + Swish epilogue, per batch element in the block (static unroll; nb tiny).
    for b in range(nb):
        acc = acc_all[:, b * ohw:(b + 1) * ohw]                    # [out_c, ohw]

        # Per-channel sum / sum-of-squares (lane reduce) with the conv bias folded in
        # analytically (avoids a full-tile bias add).
        s0 = jnp.sum(acc, axis=1, keepdims=True)                   # [out_c, 1]
        ss0 = jnp.sum(acc * acc, axis=1, keepdims=True)            # [out_c, 1]
        s = s0 + float(ohw) * bias
        ss = ss0 + 2.0 * bias * s0 + float(ohw) * bias * bias

        # Single tiny matmul turns per-channel stats into per-channel group stats.
        stats = jnp.concatenate([s, ss], axis=1)                   # [out_c, 2]
        gstats = jnp.dot(a_ref[...], stats,
                         preferred_element_type=jnp.float32)       # [out_c, 2]
        mean = gstats[:, 0:1]
        var = jnp.maximum(gstats[:, 1:2] - mean * mean, 0.0)       # clamp: NaN guard
        inv = lax.rsqrt(var + eps)                                 # EUP

        # Fused per-channel affine: y = acc*scale + shift  (2 full-tile VPU passes).
        scale = inv * gamma
        shift = (bias - mean) * scale + beta
        y = acc * scale + shift
        if is_activate:
            # Swish with the EUP approx-reciprocal path.
            y = y * pl.reciprocal(1.0 + jnp.exp(-y), approx=True)
        o_ref[0, b] = y


# -------------------------------- wrapper ---------------------------------- #

def _pick_batch_block(N, K, out_c, OHW):
    """Largest divisor Nb of N with >= 2 grid steps (v7x: 2 TCs) under a VMEM budget."""
    budget = 24 * 1024 * 1024
    best = 1
    for nb in range(1, N + 1):
        if N % nb:
            continue
        if N >= 2 and N // nb < 2:        # keep >= 2 parallel steps for v7x megacore
            continue
        # rough double-buffered footprint: patches (bf16) + output (f32) + acc (f32)
        foot = nb * OHW * (2 * K * 2 + 2 * out_c * 4 + out_c * 4)
        if foot <= budget:
            best = nb
    return best


def conv_groupnorm(x, conv_w, conv_b, gn_gamma, gn_beta, *,
                   stride, padding, num_groups=16, eps=1e-6, is_activate=True,
                   batch_block=None, matmul_dtype=jnp.bfloat16):
    """x: [N, C_in, H, W] f32 (NCHW).  Returns [N, out_c, OH, OW] f32."""
    N, C_in, H, W = x.shape
    out_c, _, kh, kw = conv_w.shape
    OH = (H + 2 * padding - kh) // stride + 1
    OW = (W + 2 * padding - kw) // stride + 1
    K = C_in * kh * kw
    OHW = OH * OW

    assert out_c % num_groups == 0, "out_c must be divisible by num_groups"
    assert out_c % 8 == 0, "out_c must be a multiple of 8 (sublane tiling)"
    assert OHW % 128 == 0, "OH*OW must be a multiple of 128 (lane-dense stores)"
    Cg = out_c // num_groups

    nb = batch_block if batch_block is not None else _pick_batch_block(N, K, out_c, OHW)
    assert N % nb == 0, "batch_block must divide N"
    n_blocks = N // nb

    # --- im2col glue (plain JAX), in [n_blocks, K, nb*OHW] layout, bf16 operands ---
    # TODO(synk): at production sizes, do this in-kernel via tap accumulation instead.
    xp = jnp.pad(x, ((0, 0), (0, 0), (padding, padding), (padding, padding)))
    cols = []
    for i in range(kh):
        for j in range(kw):
            cols.append(xp[:, :, i:i + stride * OH:stride, j:j + stride * OW:stride])
    patches = jnp.stack(cols, axis=2)                     # [N, C, kh*kw, OH, OW]
    patches = patches.reshape(N, K, OHW)                  # K order = (c, i, j)
    patches = patches.reshape(n_blocks, nb, K, OHW).transpose(0, 2, 1, 3)
    patches = patches.reshape(n_blocks, K, nb * OHW).astype(matmul_dtype)

    w2 = conv_w.reshape(out_c, K).astype(matmul_dtype)    # [out_c, K] (same K order)

    # Packed per-channel params: (conv bias, gamma, beta) -> one [out_c, 3] DMA.
    params = jnp.stack([conv_b, gn_gamma, gn_beta], axis=1).astype(jnp.float32)

    # Group-averaging matrix: A[c, c'] = 1/(Cg*OHW) if c, c' share a group else 0.
    cidx = jnp.arange(out_c)
    same_group = (cidx[:, None] // Cg) == (cidx[None, :] // Cg)
    A = same_group.astype(jnp.float32) / float(Cg * OHW)

    cost = pl.CostEstimate(
        flops=2 * N * out_c * K * OHW + 2 * N * out_c * out_c * 2,
        transcendentals=(N * out_c * OHW) if is_activate else 0,
        bytes_accessed=(patches.size * patches.dtype.itemsize
                        + w2.size * w2.dtype.itemsize
                        + params.size * 4 + A.size * 4
                        + N * out_c * OHW * 4))

    out_blk = pl.pallas_call(
        functools.partial(_fused_conv_gn_swish_kernel,
                          eps=eps, is_activate=is_activate, nb=nb, ohw=OHW),
        out_shape=jax.ShapeDtypeStruct((n_blocks, nb, out_c, OHW), jnp.float32),
        grid=(n_blocks,),
        in_specs=[
            pl.BlockSpec((1, K, nb * OHW), lambda n: (n, 0, 0)),
            pl.BlockSpec((out_c, K), lambda n: (0, 0)),
            pl.BlockSpec((out_c, 3), lambda n: (0, 0)),
            pl.BlockSpec((out_c, out_c), lambda n: (0, 0)),
        ],
        out_specs=pl.BlockSpec((1, nb, out_c, OHW), lambda n: (n, 0, 0, 0)),
        compiler_params=pltpu.CompilerParams(
            dimension_semantics=("parallel",)),
        cost_estimate=cost,
    )(patches, w2, params, A)

    return out_blk.reshape(N, out_c, OH, OW)


# ------------------------- pure-JAX reference (check) ---------------------- #

def _reference(x, conv_w, conv_b, gn_gamma, gn_beta, *, stride, padding,
               num_groups=16, eps=1e-6, is_activate=True,
               matmul_dtype=jnp.float32):
    y = lax.conv_general_dilated(
        x.astype(matmul_dtype), conv_w.astype(matmul_dtype),
        window_strides=(stride, stride),
        padding=[(padding, padding), (padding, padding)],
        dimension_numbers=("NCHW", "OIHW", "NCHW"),
        preferred_element_type=jnp.float32)
    y = y + conv_b[None, :, None, None]
    N, C, H, W = y.shape
    yg = y.reshape(N, num_groups, C // num_groups, H, W)
    mean = yg.mean(axis=(2, 3, 4), keepdims=True)
    var = ((yg - mean) ** 2).mean(axis=(2, 3, 4), keepdims=True)
    yg = (yg - mean) * lax.rsqrt(var + eps)
    y = yg.reshape(N, C, H, W) * gn_gamma[None, :, None, None] + gn_beta[None, :, None, None]
    if is_activate:
        y = y * jax.nn.sigmoid(y)
    return y


# ---------------------------------- main ----------------------------------- #

if __name__ == "__main__":
    # Module config: Conv_GroupNorm(in_c=4, out_c=32, kernel_size=3, stride=1, padding=1)
    # (out_c must be divisible by the GroupNorm default of 16 groups).
    N, C_in, H, W = 2, 4, 16, 16
    out_c, ksize, stride, padding = 32, 3, 1, 1

    key = jax.random.PRNGKey(0)
    k_x, k_w, k_b, k_g, k_bt, k_x2 = jax.random.split(key, 6)

    x = jax.random.normal(k_x, (N, C_in, H, W), dtype=jnp.float32)
    conv_w = jax.random.normal(k_w, (out_c, C_in, ksize, ksize), dtype=jnp.float32) * 0.1
    conv_b = jax.random.normal(k_b, (out_c,), dtype=jnp.float32) * 0.1
    gn_gamma = 1.0 + 0.1 * jax.random.normal(k_g, (out_c,), dtype=jnp.float32)
    gn_beta = 0.1 * jax.random.normal(k_bt, (out_c,), dtype=jnp.float32)

    out = conv_groupnorm(x, conv_w, conv_b, gn_gamma, gn_beta,
                         stride=stride, padding=padding, is_activate=True)
    out = jax.block_until_ready(out)

    # Reference with matched bf16 matmul operands (epilogue in f32), so the comparison
    # measures kernel correctness rather than bf16-vs-f32 conv rounding.
    ref = _reference(x, conv_w, conv_b, gn_gamma, gn_beta,
                     stride=stride, padding=padding, is_activate=True,
                     matmul_dtype=jnp.bfloat16)
    assert out.shape == (N, out_c, H, W)
    assert jnp.allclose(out, ref, atol=1e-2, rtol=1e-2), "mismatch vs reference (N=2)"

    # Also exercise the batch-blocked path (Nb=2 per grid step, 2 parallel grid steps).
    x4 = jax.random.normal(k_x2, (4, C_in, H, W), dtype=jnp.float32)
    out4 = conv_groupnorm(x4, conv_w, conv_b, gn_gamma, gn_beta,
                          stride=stride, padding=padding, is_activate=True)
    out4 = jax.block_until_ready(out4)
    ref4 = _reference(x4, conv_w, conv_b, gn_gamma, gn_beta,
                      stride=stride, padding=padding, is_activate=True,
                      matmul_dtype=jnp.bfloat16)
    assert out4.shape == (4, out_c, H, W)
    assert jnp.allclose(out4, ref4, atol=1e-2, rtol=1e-2), "mismatch vs reference (N=4)"

    print("KERNEL_OK")
</pallas_src>

<mosaic_0001>
module attributes {stable_mosaic.version = 11 : i64} {
  func.func @_fused_conv_gn_swish_kernel(%arg0: i32, %arg1: memref<1x36x256xbf16, #tpu.memory_space<vmem>>, %arg2: memref<32x36xbf16, #tpu.memory_space<vmem>>, %arg3: memref<32x3xf32, #tpu.memory_space<vmem>>, %arg4: memref<32x32xf32, #tpu.memory_space<vmem>>, %arg5: memref<1x1x32x256xf32, #tpu.memory_space<vmem>>) attributes {dimension_semantics = [#tpu.dimension_semantics<parallel>], iteration_bounds = array<i64: 2>, scalar_prefetch = 0 : i64, scratch_operands = 0 : i64, tpu.core_type = #tpu.core_type<tc>, window_params = [{transform_indices = @transform_0, window_bounds = array<i64: 1, 36, 256>}, {pipeline_mode = #tpu.pipeline_mode<synchronous>, transform_indices = @transform_1, window_bounds = array<i64: 32, 36>}, {pipeline_mode = #tpu.pipeline_mode<synchronous>, transform_indices = @transform_2, window_bounds = array<i64: 32, 3>}, {pipeline_mode = #tpu.pipeline_mode<synchronous>, transform_indices = @transform_3, window_bounds = array<i64: 32, 32>}, {transform_indices = @transform_4, window_bounds = array<i64: 1, 1, 32, 256>}]} {
    %c0 = arith.constant 0 : index
    %c0_0 = arith.constant 0 : index
    %0 = vector.load %arg3[%c0, %c0_0] : memref<32x3xf32, #tpu.memory_space<vmem>>, vector<32x1xf32>
    %c0_1 = arith.constant 0 : index
    %c1 = arith.constant 1 : index
    %1 = vector.load %arg3[%c0_1, %c1] : memref<32x3xf32, #tpu.memory_space<vmem>>, vector<32x1xf32>
    %c0_2 = arith.constant 0 : index
    %c2 = arith.constant 2 : index
    %2 = vector.load %arg3[%c0_2, %c2] : memref<32x3xf32, #tpu.memory_space<vmem>>, vector<32x1xf32>
    %c0_3 = arith.constant 0 : index
    %c0_4 = arith.constant 0 : index
    %3 = vector.load %arg2[%c0_3, %c0_4] : memref<32x36xbf16, #tpu.memory_space<vmem>>, vector<32x36xbf16>
    %c0_5 = arith.constant 0 : index
    %c0_6 = arith.constant 0 : index
    %c0_7 = arith.constant 0 : index
    %4 = vector.load %arg1[%c0_5, %c0_6, %c0_7] : memref<1x36x256xbf16, #tpu.memory_space<vmem>>, vector<1x36x256xbf16>
    %5 = vector.shape_cast %4 : vector<1x36x256xbf16> to vector<36x256xbf16>
    %cst = arith.constant dense<0.000000e+00> : vector<32x256xf32>
    %6 = tpu.matmul %3, %5, %cst {dimension_numbers = #tpu.dot_dimension_numbers<[1], [0], [0], [1], [0, 0, 1, 1], [], []>} : vector<32x36xbf16>, vector<36x256xbf16>, vector<32x256xf32> -> vector<32x256xf32>
    %cst_8 = arith.constant dense<0.000000e+00> : vector<32xf32>
    %7 = vector.multi_reduction <add>, %6, %cst_8 [1] : vector<32x256xf32> to vector<32xf32>
    %8 = vector.shape_cast %7 : vector<32xf32> to vector<32x1xf32>
    %9 = arith.mulf %6, %6 : vector<32x256xf32>
    %cst_9 = arith.constant dense<0.000000e+00> : vector<32xf32>
    %10 = vector.multi_reduction <add>, %9, %cst_9 [1] : vector<32x256xf32> to vector<32xf32>
    %11 = vector.shape_cast %10 : vector<32xf32> to vector<32x1xf32>
    %cst_10 = arith.constant 2.560000e+02 : f32
    %12 = vector.broadcast %cst_10 : f32 to vector<32x1xf32>
    %13 = arith.mulf %12, %0 : vector<32x1xf32>
    %14 = arith.addf %8, %13 : vector<32x1xf32>
    %cst_11 = arith.constant 2.000000e+00 : f32
    %15 = vector.broadcast %cst_11 : f32 to vector<32x1xf32>
    %16 = arith.mulf %15, %0 : vector<32x1xf32>
    %17 = arith.mulf %16, %8 : vector<32x1xf32>
    %18 = arith.addf %11, %17 : vector<32x1xf32>
    %cst_12 = arith.constant 2.560000e+02 : f32
    %19 = vector.broadcast %cst_12 : f32 to vector<32x1xf32>
    %20 = arith.mulf %19, %0 : vector<32x1xf32>
    %21 = arith.mulf %20, %0 : vector<32x1xf32>
    %22 = arith.addf %18, %21 : vector<32x1xf32>
    %23 = tpu.concatenate %14, %22 in 1 : vector<32x1xf32>, vector<32x1xf32> -> vector<32x2xf32>
    %c0_13 = arith.constant 0 : index
    %c0_14 = arith.constant 0 : index
    %24 = vector.load %arg4[%c0_13, %c0_14] : memref<32x32xf32, #tpu.memory_space<vmem>>, vector<32x32xf32>
    %cst_15 = arith.constant dense<0.000000e+00> : vector<32x2xf32>
    %25 = tpu.matmul %24, %23, %cst_15 {dimension_numbers = #tpu.dot_dimension_numbers<[1], [0], [0], [1], [0, 0, 1, 1], [], []>} : vector<32x32xf32>, vector<32x2xf32>, vector<32x2xf32> -> vector<32x2xf32>
    %26 = vector.extract_strided_slice %25 {offsets = [0, 0], sizes = [32, 1], strides = [1, 1]} : vector<32x2xf32> to vector<32x1xf32>
    %27 = vector.extract_strided_slice %25 {offsets = [0, 1], sizes = [32, 1], strides = [1, 1]} : vector<32x2xf32> to vector<32x1xf32>
    %28 = arith.mulf %26, %26 : vector<32x1xf32>
    %29 = arith.subf %27, %28 : vector<32x1xf32>
    %cst_16 = arith.constant 0.000000e+00 : f32
    %30 = vector.broadcast %cst_16 : f32 to vector<32x1xf32>
    %31 = arith.maximumf %29, %30 : vector<32x1xf32>
    %cst_17 = arith.constant 9.99999997E-7 : f32
    %32 = vector.broadcast %cst_17 : f32 to vector<32x1xf32>
    %33 = arith.addf %31, %32 : vector<32x1xf32>
    %34 = math.rsqrt %33 : vector<32x1xf32>
    %35 = arith.mulf %34, %1 : vector<32x1xf32>
    %36 = arith.subf %0, %26 : vector<32x1xf32>
    %37 = arith.mulf %36, %35 : vector<32x1xf32>
    %38 = arith.addf %37, %2 : vector<32x1xf32>
    %39 = vector.broadcast %35 : vector<32x1xf32> to vector<32x256xf32>
    %40 = arith.mulf %6, %39 : vector<32x256xf32>
    %41 = vector.broadcast %38 : vector<32x1xf32> to vector<32x256xf32>
    %42 = arith.addf %40, %41 : vector<32x256xf32>
    %cst_18 = arith.constant 0.000000e+00 : f32
    %43 = vector.broadcast %cst_18 : f32 to vector<32x256xf32>
    %44 = arith.subf %43, %42 : vector<32x256xf32>
    %45 = math.exp %44 : vector<32x256xf32>
    %cst_19 = arith.constant 1.000000e+00 : f32
    %46 = vector.broadcast %cst_19 : f32 to vector<32x256xf32>
    %47 = arith.addf %46, %45 : vector<32x256xf32>
    %48 = tpu.reciprocal %47 {approx = true} : vector<32x256xf32> -> vector<32x256xf32>
    %49 = arith.mulf %42, %48 : vector<32x256xf32>
    %c0_20 = arith.constant 0 : index
    %c0_21 = arith.constant 0 : index
    %c0_22 = arith.constant 0 : index
    %c0_23 = arith.constant 0 : index
    %50 = vector.load %arg5[%c0_20, %c0_21, %c0_22, %c0_23] : memref<1x1x32x256xf32, #tpu.memory_space<vmem>>, vector<1x1x32x256xf32>
    %51 = vector.shape_cast %50 : vector<1x1x32x256xf32> to vector<32x256xf32>
    %52 = vector.shape_cast %49 : vector<32x256xf32> to vector<1x1x32x256xf32>
    tpu.vector_store %arg5[%c0_20, %c0_21, %c0_22, %c0_23], %52 {strides = array<i32>} : memref<1x1x32x256xf32, #tpu.memory_space<vmem>>, vector<1x1x32x256xf32>,
    return
  }
  func.func @transform_0(%arg0: i32) -> (i32, i32, i32) {
    %c0_i32 = arith.constant 0 : i32
    %c0_i32_0 = arith.constant 0 : i32
    %c0_i32_1 = arith.constant 0 : i32
    return %arg0, %c0_i32, %c0_i32_0 : i32, i32, i32
  }
  func.func @transform_1(%arg0: i32) -> (i32, i32) {
    %c0_i32 = arith.constant 0 : i32
    %c0_i32_0 = arith.constant 0 : i32
    %c0_i32_1 = arith.constant 0 : i32
    return %c0_i32, %c0_i32_0 : i32, i32
  }
  func.func @transform_2(%arg0: i32) -> (i32, i32) {
    %c0_i32 = arith.constant 0 : i32
    %c0_i32_0 = arith.constant 0 : i32
    %c0_i32_1 = arith.constant 0 : i32
    return %c0_i32, %c0_i32_0 : i32, i32
  }
  func.func @transform_3(%arg0: i32) -> (i32, i32) {
    %c0_i32 = arith.constant 0 : i32
    %c0_i32_0 = arith.constant 0 : i32
    %c0_i32_1 = arith.constant 0 : i32
    return %c0_i32, %c0_i32_0 : i32, i32
  }
  func.func @transform_4(%arg0: i32) -> (i32, i32, i32, i32) {
    %c0_i32 = arith.constant 0 : i32
    %c0_i32_0 = arith.constant 0 : i32
    %c0_i32_1 = arith.constant 0 : i32
    %c0_i32_2 = arith.constant 0 : i32
    return %arg0, %c0_i32, %c0_i32_0, %c0_i32_1 : i32, i32, i32, i32
  }
}

</mosaic_0001>

<llo_original>
// kernel: tpu_custom_call.1
$region0: #{tpu_custom_call.1}
  #allocation0 [shape = 'u32[]', space=smem, size = 0x4, offset = 0x4, fixed_abs, tag = 'smem constant byte address 0x4 - core index']
  #allocation1 [shape = 'u32[72,128]{1,0:T(1,128)}', space=vmem, size = 0x9000, scoped, tag = 'internal scratch']
  %s0 = inlined_call_operand.vmem [shape: bf16[2,36,256], index: 0, kind: input, shape index: {}]
  %s1 = inlined_call_operand.vmem [shape: bf16[32,36], index: 1, kind: input, shape index: {}]
  %s2 = inlined_call_operand.vmem [shape: f32[32,3], index: 2, kind: input, shape index: {}]
  %s3 = inlined_call_operand.vmem [shape: f32[32,32], index: 3, kind: input, shape index: {}]
  %s4 = inlined_call_operand.hbm [shape: f32[2,1,32,256], index: 4, kind: output, shape index: {}]
  %s5 = sld [smem:[#allocation0]]
  $region49: #{tpu_custom_call.1} parent=0
    _
  %s7 = ssub.s32 1, %s5
  %s8 = scalar_select 0, %s7, %s5
  $region1: #{tpu_custom_call.1} parent=0
    #allocation2 [shape = 'u8[65536]{0}', space=vmem, size = 0x10000, scoped, tag = 'output window, operand 0']
    #allocation3 [shape = 's32[2]{0}', space=sflag, size = 0x8, scoped, tag = 'scoped memory for tpu_custom_call.1']
    %9 = vsyncpa [#allocation3], 0
    %s10 = scalar_lea.sflag [#allocation3], 1
    %11 = vsyncpa %s10, 0
    loop: start=0, step=1, limit=4
    $region2: #{tpu_custom_call.1} parent=1 // loop_pre_header
      _
    $region3: #{tpu_custom_call.1} parent=1 // loop_header
      %s13 = sphi 0, %s17
      %p14 = scmp.ge.s32.totalorder %s13, 4
      %s23 = sphi 0, %s25
      %s26 = sphi 0, %s23
      %s27 = sphi 0, %s26
      %s43 = sphi 0, %s27
      %s47 = sphi 0, %s47
      %s49 = sphi 0, %s47
      %s50 = sphi 0, %s49
      %s64 = sphi 0, %s50
      %s68 = sphi 0, %s68
      %s70 = sphi 0, %s68
      %s71 = sphi 0, %s70
      %s85 = sphi 0, %s71
      %s89 = sphi 0, %s89
      %s91 = sphi 0, %s89
      %s92 = sphi 0, %s91
      %s106 = sphi 0, %s92
      %s112 = sphi 0, %s114
      %s115 = sphi 0, %s112
      %s116 = sphi 0, %s115
      %s132 = sphi 0, %s116
    $region4: #{tpu_custom_call.1} parent=1 // loop_header_branch
      %16 = sbr.rel (%p14) target = $region8
    $region5: #{tpu_custom_call.1} parent=1 // loop_body
      %s18 = ssub.s32 %s13, 1
      %s19 = ssub.s32 %s13, 2
      %s20 = sadd.s32 %s13, 1
      %s21 = ssub.s32 %s13, %s20
      %p22 = scmp.eq.s32.totalorder %s21, 0
      %s24 = sadd.s32 %s23, 1
      %s25 = scalar_select %p22, %s23, %s24
      %p28 = pneg %p22
      %p29 = scmp.eq.s32.totalorder %s13, 1
      %p30 = por %p28, %p29
      %p31 = scmp.ne.s32.totalorder %s23, %s26
      %p32 = scmp.eq.s32.totalorder %s13, 0
      %p33 = por %p31, %p32
      %p34 = scmp.ne.s32.totalorder %s23, %s26
      %p35 = scmp.eq.s32.totalorder %s18, 1
      %p36 = por %p34, %p35
      %p37 = scmp.ne.s32.totalorder %s26, %s27
      %p38 = scmp.eq.s32.totalorder %s18, 0
      %p39 = por %p37, %p38
      %p40 = scmp.ne.s32.totalorder %s26, %s27
      %p41 = scmp.eq.s32.totalorder %s19, 1
      %p42 = por %p40, %p41
      %p44 = scmp.ne.s32.totalorder %s27, %s43
      %p45 = scmp.eq.s32.totalorder %s19, 0
      %p46 = por %p44, %p45
      %s48 = sadd.s32 %s47, 1
      %p51 = scmp.eq.s32.totalorder %s13, 1
      %p52 = scmp.ne.s32.totalorder %s47, %s49
      %p53 = scmp.eq.s32.totalorder %s13, 0
      %p54 = por %p52, %p53
      %p55 = scmp.ne.s32.totalorder %s47, %s49
      %p56 = scmp.eq.s32.totalorder %s18, 1
      %p57 = por %p55, %p56
      %p58 = scmp.ne.s32.totalorder %s49, %s50
      %p59 = scmp.eq.s32.totalorder %s18, 0
      %p60 = por %p58, %p59
      %p61 = scmp.ne.s32.totalorder %s49, %s50
      %p62 = scmp.eq.s32.totalorder %s19, 1
      %p63 = por %p61, %p62
      %p65 = scmp.ne.s32.totalorder %s50, %s64
      %p66 = scmp.eq.s32.totalorder %s19, 0
      %p67 = por %p65, %p66
      %s69 = sadd.s32 %s68, 1
      %p72 = scmp.eq.s32.totalorder %s13, 1
      %p73 = scmp.ne.s32.totalorder %s68, %s70
      %p74 = scmp.eq.s32.totalorder %s13, 0
      %p75 = por %p73, %p74
      %p76 = scmp.ne.s32.totalorder %s68, %s70
      %p77 = scmp.eq.s32.totalorder %s18, 1
      %p78 = por %p76, %p77
      %p79 = scmp.ne.s32.totalorder %s70, %s71
      %p80 = scmp.eq.s32.totalorder %s18, 0
      %p81 = por %p79, %p80
      %p82 = scmp.ne.s32.totalorder %s70, %s71
      %p83 = scmp.eq.s32.totalorder %s19, 1
      %p84 = por %p82, %p83
      %p86 = scmp.ne.s32.totalorder %s71, %s85
      %p87 = scmp.eq.s32.totalorder %s19, 0
      %p88 = por %p86, %p87
      %s90 = sadd.s32 %s89, 1
      %p93 = scmp.eq.s32.totalorder %s13, 1
      %p94 = scmp.ne.s32.totalorder %s89, %s91
      %p95 = scmp.eq.s32.totalorder %s13, 0
      %p96 = por %p94, %p95
      %p97 = scmp.ne.s32.totalorder %s89, %s91
      %p98 = scmp.eq.s32.totalorder %s18, 1
      %p99 = por %p97, %p98
      %p100 = scmp.ne.s32.totalorder %s91, %s92
      %p101 = scmp.eq.s32.totalorder %s18, 0
      %p102 = por %p100, %p101
      %p103 = scmp.ne.s32.totalorder %s91, %s92
      %p104 = scmp.eq.s32.totalorder %s19, 1
      %p105 = por %p103, %p104
      %p107 = scmp.ne.s32.totalorder %s92, %s106
      %p108 = scmp.eq.s32.totalorder %s19, 0
      %p109 = por %p107, %p108
      %s110 = ssub.s32 %s13, %s20
      %p111 = scmp.eq.s32.totalorder %s110, 0
      %s113 = sadd.s32 %s112, 1
      %s114 = scalar_select %p111, %s112, %s113
      %p117 = pneg %p111
      %p118 = scmp.eq.s32.totalorder %s13, 1
      %p119 = por %p117, %p118
      %p120 = scmp.ne.s32.totalorder %s112, %s115
      %p121 = scmp.eq.s32.totalorder %s13, 0
      %p122 = por %p120, %p121
      %p123 = scmp.ne.s32.totalorder %s112, %s115
      %p124 = scmp.eq.s32.totalorder %s18, 1
      %p125 = por %p123, %p124
      %p126 = scmp.ne.s32.totalorder %s115, %s116
      %p127 = scmp.eq.s32.totalorder %s18, 0
      %p128 = por %p126, %p127
      %p129 = scmp.ne.s32.totalorder %s115, %s116
      %p130 = scmp.eq.s32.totalorder %s19, 1
      %p131 = por %p129, %p130
      %p133 = scmp.ne.s32.totalorder %s116, %s132
      %p134 = scmp.eq.s32.totalorder %s19, 0
      %p135 = por %p133, %p134
      %p136 = scmp.le.s32.totalorder 1, %s13
      %p137 = scmp.lt.s32.totalorder %s13, 3
      %p138 = pnand %p136, %p137
      %p139 = pneg %p138
      // Predicated region
      $region9: #{tpu_custom_call.1} parent=5 // pred_check
        _
      $region10: #{tpu_custom_call.1} parent=5 // pred_check_branch
        %141 = sbr.rel (%p138) target = $region12
      $region11: #{tpu_custom_call.1} parent=5 // pred_region
        %s142 = ssub.s32 %s13, 1
        // Predicated region
        $region13: #{tpu_custom_call.1} parent=11 // pred_check
          %p143 = pneg %p60
        $region14: #{tpu_custom_call.1} parent=11 // pred_check_branch
          %145 = sbr.rel (%p143) target = $region16
        $region15: #{tpu_custom_call.1} parent=11 // pred_region
          _
        $region16: #{tpu_custom_call.1} parent=11 // pred_fallthru
          _
        // Predicated region
        $region17: #{tpu_custom_call.1} parent=11 // pred_check
          %p146 = pneg %p81
        $region18: #{tpu_custom_call.1} parent=11 // pred_check_branch
          %148 = sbr.rel (%p146) target = $region20
        $region19: #{tpu_custom_call.1} parent=11 // pred_region
          _
        $region20: #{tpu_custom_call.1} parent=11 // pred_fallthru
          _
        // Predicated region
        $region21: #{tpu_custom_call.1} parent=11 // pred_check
          %p149 = pneg %p102
        $region22: #{tpu_custom_call.1} parent=11 // pred_check_branch
          %151 = sbr.rel (%p149) target = $region24
        $region23: #{tpu_custom_call.1} parent=11 // pred_region
          _
        $region24: #{tpu_custom_call.1} parent=11 // pred_fallthru
          _
      $region12: #{tpu_custom_call.1} parent=5 // pred_fallthru
        _
      %p152 = scmp.lt.s32.totalorder %s13, 2
      // Predicated region
      $region25: #{tpu_custom_call.1} parent=5 // pred_check
        %p153 = pneg %p152
      $region26: #{tpu_custom_call.1} parent=5 // pred_check_branch
        %155 = sbr.rel (%p153) target = $region28
      $region27: #{tpu_custom_call.1} parent=5 // pred_region
        // Predicated region
        $region29: #{tpu_custom_call.1} parent=27 // pred_check
          %p156 = pneg %p33
        $region30: #{tpu_custom_call.1} parent=27 // pred_check_branch
          %158 = sbr.rel (%p156) target = $region32
        $region31: #{tpu_custom_call.1} parent=27 // pred_region
          %p159 = scmp.lt.s32.totalorder %s13, 1
          %s160 = scalar_select %p159, %s13, 1
          %s161 = smul.addr %s160, 10
          %s162 = smul.addr %s161, 4
          %s163 = scalar_lea.vmem %s0, %s162
        $region32: #{tpu_custom_call.1} parent=27 // pred_fallthru
          _
      $region28: #{tpu_custom_call.1} parent=5 // pred_fallthru
        _
      %p164 = scmp.le.s32.totalorder 1, %s13
      %p165 = scmp.lt.s32.totalorder %s13, 3
      %p166 = pnand %p164, %p165
      %p167 = pneg %p166
      // Predicated region
      $region33: #{tpu_custom_call.1} parent=5 // pred_check
        _
      $region34: #{tpu_custom_call.1} parent=5 // pred_check_branch
        %169 = sbr.rel (%p166) target = $region36
      $region35: #{tpu_custom_call.1} parent=5 // pred_region
        %s170 = ssub.s32 %s13, 1
        %p171 = scmp.lt.s32.totalorder %s18, 1
        %s172 = scalar_select %p171, %s18, 1
        %s173 = smul.addr %s172, 10
        %s174 = smul.addr %s173, 4
        %s175 = scalar_lea.vmem %s0, %s174
        %p176 = pneg %p39
        %p177 = pneg %p36
        %p178 = pneg %p60
        %p179 = pneg %p57
        %p180 = pneg %p81
        %p181 = pneg %p78
        %p182 = pneg %p102
        %p183 = pneg %p99
        %p184 = pneg %p128
        %p185 = pneg %p125
        %s186 = sand.u32 %s115, 1
        %s187 = scalar_lea.sflag [#allocation3], %s186
        %s188 = sand.u32 %s115, 1
        %s189 = smul.addr %s188, 64
        %s190 = scalar_lea.vmem [#allocation2], %s189
        %p191 = scmp.lt.s32.totalorder %s18, 1
        %s192 = scalar_select %p191, %s18, 1
        %s193 = smul.addr %s192, 10
        %s194 = smul.addr %s193, 4
        %s195 = scalar_lea.vmem %s0, %s194
        %v197 = vld [vmem:[%s2] sm:$0xff]
        %v198 = vld [vmem:[%s2 + $0x8] sm:$0xff]
        %v199 = vld [vmem:[%s2 + $0x10] sm:$0xff]
        %v200 = vld [vmem:[%s2 + $0x18] sm:$0xff]
        %v201 = vld [vmem:[%s1] sm:$0xf]
        %v202 = vld [vmem:[%s1 + $0x4] sm:$0xf]
        %v203 = vld [vmem:[%s1 + $0x8] sm:$0xf]
        %v204 = vld [vmem:[%s1 + $0xc] sm:$0xf]
        %v205 = vld [vmem:[%s195] sm:$0xff]
        %v206 = vld [vmem:[%s195 + $0x8] sm:$0xff]
        %v207 = vld [vmem:[%s195 + $0x10] sm:$0xff]
        %v208 = vld [vmem:[%s195 + $0x18] sm:$0xff]
        %v209 = vld [vmem:[%s195 + $0x20] sm:$0x33]
        %v214 = vunpack.c.l.b16 %v201
        %v215 = vunpack.c.l.b16 %v202
        %v216 = vunpack.c.l.b16 %v203
        %v217 = vunpack.c.l.b16 %v204
        %v218 = vpack.c.b16 %v215, %v214
        %v219 = vpack.c.b16 %v217, %v216
        %v225 = vunpack.c.l.b16 %v205
        %v226 = vunpack.c.h.b16 %v205
        %v227 = vunpack.c.l.b16 %v206
        %v228 = vunpack.c.h.b16 %v206
        %v229 = vunpack.c.l.b16 %v207
        %v230 = vunpack.c.h.b16 %v207
        %v231 = vunpack.c.l.b16 %v208
        %v232 = vunpack.c.h.b16 %v208
        %v233 = vunpack.c.l.b16 %v209
        %v234 = vunpack.c.h.b16 %v209
        %v235 = vpack.c.b16 %v227, %v225
        %v236 = vpack.c.b16 %v228, %v226
        %v237 = vpack.c.b16 %v231, %v229
        %v238 = vpack.c.b16 %v232, %v230
        %v239 = vpack.c.b16 %v233, %v233
        %v240 = vpack.c.b16 %v234, %v234
        %vm245 = vcmask 293888
        %v247 = vsel %vm245, %v218, 0
        %v250 = vsel %vm245, %v219, 0
        %vm252 = vcmask 1041408
        %v254 = vsel %vm252, %v239, 0
        %v257 = vsel %vm252, %v240, 0
        %259 = vmatpush.bf16.msra.mxu0 0
        %260 = vmatpush.bf16.msra.mxu0 0
        %261 = vmatpush.bf16.msra.mxu0 0
        %262 = vmatpush.bf16.msra.mxu0 0
        %263 = vmatpush.bf16.msra.mxu0 0
        %264 = vmatpush.bf16.msra.mxu0 %v254
        %265 = vmatpush.bf16.msra.mxu0 %v237
        %266 = vmatpush.bf16.msra.mxu0 %v235
        %267 = vmatmul.bf16.gmra.mxu0 %v247
        %v268 = vpop.f32.mrf.mxu0
        %v269 = vadd.f32 0.0, %v268
        %v270 = vpop.f32.mrf.mxu0
        %v271 = vadd.f32 0.0, %v270
        %272 = vmatmul.bf16.gmra.mxu0 %v250
        %v273 = vpop.f32.mrf.mxu0
        %v274 = vadd.f32 0.0, %v273
        %v275 = vpop.f32.mrf.mxu0
        %v276 = vadd.f32 0.0, %v275
        %277 = vdwg.mxu0
        %278 = vmatpush.bf16.msra.mxu0 0
        %279 = vmatpush.bf16.msra.mxu0 0
        %280 = vmatpush.bf16.msra.mxu0 0
        %281 = vmatpush.bf16.msra.mxu0 0
        %282 = vmatpush.bf16.msra.mxu0 0
        %283 = vmatpush.bf16.msra.mxu0 %v257
        %284 = vmatpush.bf16.msra.mxu0 %v238
        %285 = vmatpush.bf16.msra.mxu0 %v236
        %286 = vmatmul.bf16.gmra.mxu0 %v247
        %v287 = vpop.f32.mrf.mxu0
        %v288 = vadd.f32 0.0, %v287
        %v289 = vpop.f32.mrf.mxu0
        %v290 = vadd.f32 0.0, %v289
        %291 = vmatmul.bf16.gmra.mxu0 %v250
        %v292 = vpop.f32.mrf.mxu0
        %v293 = vadd.f32 0.0, %v292
        %v294 = vpop.f32.mrf.mxu0
        %v295 = vadd.f32 0.0, %v294
        %296 = vdwg.mxu0
        %v297 = vadd.f32 %v269, %v288
        %298 = vadd.xlane.f32.xlu0 %v297
        %v299 = vpop.xlane.xlu0 %298
        %v300 = vadd.f32 %v271, %v290
        %301 = vadd.xlane.f32.xlu0 %v300
        %v302 = vpop.xlane.xlu0 %301
        %v303 = vadd.f32 %v274, %v293
        %304 = vadd.xlane.f32.xlu0 %v303
        %v305 = vpop.xlane.xlu0 %304
        %v306 = vadd.f32 %v276, %v295
        %307 = vadd.xlane.f32.xlu0 %v306
        %v308 = vpop.xlane.xlu0 %307
        %v309 = vmul.f32 %v269, %v269
        %v310 = vmul.f32 %v288, %v288
        %v311 = vmul.f32 %v271, %v271
        %v312 = vmul.f32 %v290, %v290
        %v313 = vmul.f32 %v274, %v274
        %v314 = vmul.f32 %v293, %v293
        %v315 = vmul.f32 %v276, %v276
        %v316 = vmul.f32 %v295, %v295
        %v317 = vadd.f32 %v309, %v310
        %318 = vadd.xlane.f32.xlu0 %v317
        %v319 = vpop.xlane.xlu0 %318
        %v320 = vadd.f32 %v311, %v312
        %321 = vadd.xlane.f32.xlu0 %v320
        %v322 = vpop.xlane.xlu0 %321
        %v323 = vadd.f32 %v313, %v314
        %324 = vadd.xlane.f32.xlu0 %v323
        %v325 = vpop.xlane.xlu0 %324
        %v326 = vadd.f32 %v315, %v316
        %327 = vadd.xlane.f32.xlu0 %v326
        %v328 = vpop.xlane.xlu0 %327
        %v329 = vmul.f32 %v197, 256.0
        %v330 = vmul.f32 %v198, 256.0
        %v331 = vmul.f32 %v199, 256.0
        %v332 = vmul.f32 %v200, 256.0
        %v333 = vadd.f32 %v299, %v329
        %v334 = vadd.f32 %v302, %v330
        %v335 = vadd.f32 %v305, %v331
        %v336 = vadd.f32 %v308, %v332
        %v337 = vmul.f32 %v197, 2.0
        %v338 = vmul.f32 %v198, 2.0
        %v339 = vmul.f32 %v199, 2.0
        %v340 = vmul.f32 %v200, 2.0
        %v341 = vmul.f32 %v337, %v299
        %v342 = vmul.f32 %v338, %v302
        %v343 = vmul.f32 %v339, %v305
        %v344 = vmul.f32 %v340, %v308
        %v345 = vadd.f32 %v319, %v341
        %v346 = vadd.f32 %v322, %v342
        %v347 = vadd.f32 %v325, %v343
        %v348 = vadd.f32 %v328, %v344
        %v349 = vmul.f32 %v329, %v197
        %v350 = vmul.f32 %v330, %v198
        %v351 = vmul.f32 %v331, %v199
        %v352 = vmul.f32 %v332, %v200
        %v353 = vadd.f32 %v345, %v349
        %v354 = vadd.f32 %v346, %v350
        %v355 = vadd.f32 %v347, %v351
        %v356 = vadd.f32 %v348, %v352
        %361 = vrot.lane.b32.xlu0 %v353, 1
        %v362 = vpop.permute.xlu0 %361
        %363 = vrot.lane.b32.xlu0 %v354, 1
        %v364 = vpop.permute.xlu0 %363
        %365 = vrot.lane.b32.xlu0 %v355, 1
        %v366 = vpop.permute.xlu0 %365
        %367 = vrot.lane.b32.xlu0 %v356, 1
        %v368 = vpop.permute.xlu0 %367
        %vm373 = vcmask 7168
        %v374 = vsel %vm373, %v333, %v362
        %v375 = vsel %vm373, %v334, %v364
        %v376 = vsel %vm373, %v335, %v366
        %v377 = vsel %vm373, %v336, %v368
        %v378 = vld [vmem:[%s3] sm:$0xff]
        %v379 = vld [vmem:[%s3 + $0x8] sm:$0xff]
        %v380 = vld [vmem:[%s3 + $0x10] sm:$0xff]
        %v381 = vld [vmem:[%s3 + $0x18] sm:$0xff]
        %vm382 = vcmask 261120
        %v384 = vsel %vm382, %v378, 0
        %v387 = vsel %vm382, %v379, 0
        %v390 = vsel %vm382, %v380, 0
        %v393 = vsel %vm382, %v381, 0
        %395 = vmatpush.msra.mxu0 0.0
        %396 = vmatpush.msra.mxu0 0.0
        %397 = vmatpush.msra.mxu0 0.0
        %398 = vmatpush.msra.mxu0 0.0
        %399 = vmatpush.msra.mxu0 0.0
        %400 = vmatpush.msra.mxu0 0.0
        %401 = vmatpush.msra.mxu0 0.0
        %402 = vmatpush.msra.mxu0 0.0
        %403 = vmatpush.msra.mxu0 0.0
        %404 = vmatpush.msra.mxu0 0.0
        %405 = vmatpush.msra.mxu0 0.0
        %406 = vmatpush.msra.mxu0 0.0
        %407 = vmatpush.msra.mxu0 %v377
        %408 = vmatpush.msra.mxu0 %v376
        %409 = vmatpush.msra.mxu0 %v375
        %410 = vmatpush.msra.mxu0 %v374
        %411 = vmatmul.f32.gmra.mxu0 %v384
        %v412 = vpop.f32.mrf.mxu0
        %v413 = vadd.f32 0.0, %v412
        %414 = vmatmul.f32.gmra.mxu0 %v387
        %v415 = vpop.f32.mrf.mxu0
        %v416 = vadd.f32 0.0, %v415
        %417 = vmatmul.f32.gmra.mxu0 %v390
        %v418 = vpop.f32.mrf.mxu0
        %v419 = vadd.f32 0.0, %v418
        %420 = vmatmul.f32.gmra.mxu0 %v393
        %v421 = vpop.f32.mrf.mxu0
        %v422 = vadd.f32 0.0, %v421
        %423 = vdwg.mxu0
        %v424 = vmul.f32 %v413, %v413
        %v425 = vmul.f32 %v416, %v416
        %v426 = vmul.f32 %v419, %v419
        %v427 = vmul.f32 %v422, %v422
        %432 = vrot.lane.b32.xlu0 %v424, 1
        %v433 = vpop.permute.xlu0 %432
        %434 = vrot.lane.b32.xlu0 %v425, 1
        %v435 = vpop.permute.xlu0 %434
        %436 = vrot.lane.b32.xlu0 %v426, 1
        %v437 = vpop.permute.xlu0 %436
        %438 = vrot.lane.b32.xlu0 %v427, 1
        %v439 = vpop.permute.xlu0 %438
        %v444 = vsub.f32 %v413, %v433
        %v445 = vsub.f32 %v416, %v435
        %v446 = vsub.f32 %v419, %v437
        %v447 = vsub.f32 %v422, %v439
        %v448 = vmax.f32 %v444, 0.0
        %v449 = vmax.f32 %v445, 0.0
        %v450 = vmax.f32 %v446, 0.0
        %v451 = vmax.f32 %v447, 0.0
        %v452 = vadd.f32 %v448, 1e-06
        %v453 = vadd.f32 %v449, 1e-06
        %v454 = vadd.f32 %v450, 1e-06
        %v455 = vadd.f32 %v451, 1e-06
        %v456 = vrsqrt.pop %v452
        %v457 = vmul.f32 %v456, %v452
        %v458 = vmul.f32 %v457, %v456
        %v459 = vmul.f32 0.5, %v458
        %v460 = vsub.f32 1.5, %v459
        %v461 = vmul.f32 %v456, %v460
        %vm462 = vweird.f32 %v452
        %vm463 = vweird.f32 %v456
        %vm464 = vmor %vm462, %vm463
        %v465 = vsel %vm464, %v456, %v461
        %v466 = vrsqrt.pop %v453
        %v467 = vmul.f32 %v466, %v453
        %v468 = vmul.f32 %v467, %v466
        %v469 = vmul.f32 0.5, %v468
        %v470 = vsub.f32 1.5, %v469
        %v471 = vmul.f32 %v466, %v470
        %vm472 = vweird.f32 %v453
        %vm473 = vweird.f32 %v466
        %vm474 = vmor %vm472, %vm473
        %v475 = vsel %vm474, %v466, %v471
        %v476 = vrsqrt.pop %v454
        %v477 = vmul.f32 %v476, %v454
        %v478 = vmul.f32 %v477, %v476
        %v479 = vmul.f32 0.5, %v478
        %v480 = vsub.f32 1.5, %v479
        %v481 = vmul.f32 %v476, %v480
        %vm482 = vweird.f32 %v454
        %vm483 = vweird.f32 %v476
        %vm484 = vmor %vm482, %vm483
        %v485 = vsel %vm484, %v476, %v481
        %v486 = vrsqrt.pop %v455
        %v487 = vmul.f32 %v486, %v455
        %v488 = vmul.f32 %v487, %v486
        %v489 = vmul.f32 0.5, %v488
        %v490 = vsub.f32 1.5, %v489
        %v491 = vmul.f32 %v486, %v490
        %vm492 = vweird.f32 %v455
        %vm493 = vweird.f32 %v486
        %vm494 = vmor %vm492, %vm493
        %v495 = vsel %vm494, %v486, %v491
        %v496 = vmul.f32 %v465, %v197
        %v497 = vmul.f32 %v475, %v198
        %v498 = vmul.f32 %v485, %v199
        %v499 = vmul.f32 %v495, %v200
        %v500 = vsub.f32 %v197, %v413
        %v501 = vsub.f32 %v198, %v416
        %v502 = vsub.f32 %v199, %v419
        %v503 = vsub.f32 %v200, %v422
        %508 = vrot.lane.b32.xlu0 %v496, 127
        %v509 = vpop.permute.xlu0 %508
        %510 = vrot.lane.b32.xlu0 %v497, 127
        %v511 = vpop.permute.xlu0 %510
        %512 = vrot.lane.b32.xlu0 %v498, 127
        %v513 = vpop.permute.xlu0 %512
        %514 = vrot.lane.b32.xlu0 %v499, 127
        %v515 = vpop.permute.xlu0 %514
        %v520 = vmul.f32 %v500, %v509
        %v521 = vmul.f32 %v501, %v511
        %v522 = vmul.f32 %v502, %v513
        %v523 = vmul.f32 %v503, %v515
        %528 = vrot.lane.b32.xlu0 %v197, 126
        %v529 = vpop.permute.xlu0 %528
        %530 = vrot.lane.b32.xlu0 %v198, 126
        %v531 = vpop.permute.xlu0 %530
        %532 = vrot.lane.b32.xlu0 %v199, 126
        %v533 = vpop.permute.xlu0 %532
        %534 = vrot.lane.b32.xlu0 %v200, 126
        %v535 = vpop.permute.xlu0 %534
        %v540 = vadd.f32 %v520, %v529
        %v541 = vadd.f32 %v521, %v531
        %v542 = vadd.f32 %v522, %v533
        %v543 = vadd.f32 %v523, %v535
        %544 = vset.pattern.permute.xlu0 1
        %545 = vperm.xlu0 %544, %v496
        %v546 = vpop.permute.xlu0 %545
        %548 = vset.pattern.permute.xlu0 1
        %549 = vperm.xlu0 %548, %v497
        %v550 = vpop.permute.xlu0 %549
        %552 = vset.pattern.permute.xlu0 1
        %553 = vperm.xlu0 %552, %v498
        %v554 = vpop.permute.xlu0 %553
        %556 = vset.pattern.permute.xlu0 1
        %557 = vperm.xlu0 %556, %v499
        %v558 = vpop.permute.xlu0 %557
        %v560 = vmul.f32 %v269, %v546
        %v561 = vmul.f32 %v288, %v546
        %v562 = vmul.f32 %v271, %v550
        %v563 = vmul.f32 %v290, %v550
        %v564 = vmul.f32 %v274, %v554
        %v565 = vmul.f32 %v293, %v554
        %v566 = vmul.f32 %v276, %v558
        %v567 = vmul.f32 %v295, %v558
        %569 = vset.pattern.permute.xlu0 0
        %570 = vperm.xlu0 %569, %v540
        %v571 = vpop.permute.xlu0 %570
        %574 = vset.pattern.permute.xlu0 0
        %575 = vperm.xlu0 %574, %v541
        %v576 = vpop.permute.xlu0 %575
        %579 = vset.pattern.permute.xlu0 0
        %580 = vperm.xlu0 %579, %v542
        %v581 = vpop.permute.xlu0 %580
        %584 = vset.pattern.permute.xlu0 0
        %585 = vperm.xlu0 %584, %v543
        %v586 = vpop.permute.xlu0 %585
        %v588 = vadd.f32 %v560, %v571
        %v589 = vadd.f32 %v561, %v571
        %v590 = vadd.f32 %v562, %v576
        %v591 = vadd.f32 %v563, %v576
        %v592 = vadd.f32 %v564, %v581
        %v593 = vadd.f32 %v565, %v581
        %v594 = vadd.f32 %v566, %v586
        %v595 = vadd.f32 %v567, %v586
        %v596 = vsub.f32 0.0, %v588
        %v597 = vsub.f32 0.0, %v589
        %v598 = vsub.f32 0.0, %v590
        %v599 = vsub.f32 0.0, %v591
        %v600 = vsub.f32 0.0, %v592
        %v601 = vsub.f32 0.0, %v593
        %v602 = vsub.f32 0.0, %v594
        %v603 = vsub.f32 0.0, %v595
        %v604 = vmul.f32 %v596, 1.442695
        %v605 = vpow.pop %v604
        %v606 = vmul.f32 %v597, 1.442695
        %v607 = vpow.pop %v606
        %v608 = vmul.f32 %v598, 1.442695
        %v609 = vpow.pop %v608
        %v610 = vmul.f32 %v599, 1.442695
        %v611 = vpow.pop %v610
        %v612 = vmul.f32 %v600, 1.442695
        %v613 = vpow.pop %v612
        %v614 = vmul.f32 %v601, 1.442695
        %v615 = vpow.pop %v614
        %v616 = vmul.f32 %v602, 1.442695
        %v617 = vpow.pop %v616
        %v618 = vmul.f32 %v603, 1.442695
        %v619 = vpow.pop %v618
        %v620 = vadd.f32 %v605, 1.0
        %v621 = vadd.f32 %v607, 1.0
        %v622 = vadd.f32 %v609, 1.0
        %v623 = vadd.f32 %v611, 1.0
        %v624 = vadd.f32 %v613, 1.0
        %v625 = vadd.f32 %v615, 1.0
        %v626 = vadd.f32 %v617, 1.0
        %v627 = vadd.f32 %v619, 1.0
        %v628 = vrcp.pop %v620
        %v629 = vrcp.pop %v621
        %v630 = vrcp.pop %v622
        %v631 = vrcp.pop %v623
        %v632 = vrcp.pop %v624
        %v633 = vrcp.pop %v625
        %v634 = vrcp.pop %v626
        %v635 = vrcp.pop %v627
        %v636 = vmul.f32 %v588, %v628
        %v637 = vmul.f32 %v589, %v629
        %v638 = vmul.f32 %v590, %v630
        %v639 = vmul.f32 %v591, %v631
        %v640 = vmul.f32 %v592, %v632
        %v641 = vmul.f32 %v593, %v633
        %v642 = vmul.f32 %v594, %v634
        %v643 = vmul.f32 %v595, %v635
        %644 = vst [vmem:[%s190] sm:$0xff] %v636
        %645 = vst [vmem:[%s190 + $0x8] sm:$0xff] %v637
        %646 = vst [vmem:[%s190 + $0x10] sm:$0xff] %v638
        %647 = vst [vmem:[%s190 + $0x18] sm:$0xff] %v639
        %648 = vst [vmem:[%s190 + $0x20] sm:$0xff] %v640
        %649 = vst [vmem:[%s190 + $0x28] sm:$0xff] %v641
        %650 = vst [vmem:[%s190 + $0x30] sm:$0xff] %v642
        %651 = vst [vmem:[%s190 + $0x38] sm:$0xff] %v643
        %s652 = sand.u32 %s115, 1
        %s653 = scalar_lea.sflag [#allocation3], %s652
        %s654 = sand.u32 %s115, 1
        %s655 = smul.addr %s654, 64
        %s656 = scalar_lea.vmem [#allocation2], %s655
        // Predicated region
        $region37: #{tpu_custom_call.1} parent=35 // pred_check
          %p657 = pneg %p125
        $region38: #{tpu_custom_call.1} parent=35 // pred_check_branch
          %659 = sbr.rel (%p657) target = $region40
        $region39: #{tpu_custom_call.1} parent=35 // pred_region
          %661 = vsyncadd %s653, 0
          %s662 = smul.addr %s18, 8
          %s663 = smul.addr %s662, 8
          %s664 = scalar_lea.hbm %s4, %s663
          %s665 = sshll.u32 %s656, 4
          %s666 = int_to_ptr.vmem [resolvable:$true] %s665
          %s667 = sshll.u32 %s664, 4
          %s668 = int_to_ptr.hbm [resolvable:$true] %s667
          %673 = dma.vmem_to_hbm [thread:$0]  %s666, 1024, %s668, %s653, 256, 256, 16
        $region40: #{tpu_custom_call.1} parent=35 // pred_fallthru
          _
      $region36: #{tpu_custom_call.1} parent=5 // pred_fallthru
        _
      %p674 = scmp.le.s32.totalorder 2, %s13
      // Predicated region
      $region41: #{tpu_custom_call.1} parent=5 // pred_check
        %p675 = pneg %p674
      $region42: #{tpu_custom_call.1} parent=5 // pred_check_branch
        %677 = sbr.rel (%p675) target = $region44
      $region43: #{tpu_custom_call.1} parent=5 // pred_region
        %s678 = ssub.s32 %s13, 2
        // Predicated region
        $region45: #{tpu_custom_call.1} parent=43 // pred_check
          %p679 = pneg %p131
        $region46: #{tpu_custom_call.1} parent=43 // pred_check_branch
          %681 = sbr.rel (%p679) target = $region48
        $region47: #{tpu_custom_call.1} parent=43 // pred_region
          %s682 = sand.u32 %s116, 1
          %s683 = scalar_lea.sflag [#allocation3], %s682
          %s684 = sand.u32 %s116, 1
          %s685 = smul.addr %s684, 64
          %s686 = scalar_lea.vmem [#allocation2], %s685
          %688 = dma.done %s683, 1024
        $region48: #{tpu_custom_call.1} parent=43 // pred_fallthru
          _
      $region44: #{tpu_custom_call.1} parent=5 // pred_fallthru
        _
    $region6: #{tpu_custom_call.1} parent=1 // loop_footer
      %s17 = sadd.s32 1, %s13
    $region7: #{tpu_custom_call.1} parent=1 // loop_footer_branch
      %12 = sbr.rel target = $region3
    $region8: #{tpu_custom_call.1} parent=1 // loop_exit
      _
    %689 = vsyncpa [#allocation3], 1
    %s690 = scalar_lea.sflag [#allocation3], 1
    %691 = vsyncpa %s690, 1

</llo_original>
